<compile_context>
chip_gen: v6e
topology: v6e:2x2x1
jax: 0.10.0
libtpu: 0.0.40
codegen_flags: <defaults>
</compile_context>

<pallas_src>
import numpy as np

import jax
import jax.numpy as jnp
from jax import lax
from jax.experimental import pallas as pl
from jax.experimental.pallas import tpu as pltpu


# ----------------------------------------------------------------------------
# Fused kernel.  For CE loss of sample b with sampled label y_b:
#   d2[b]  = softmax(logits[b]) - onehot(y_b)
#   g1[b]  = (d2[b] @ W2) * 1[z1[b] > 0]
#   ||dL/dW2[b]||^2 = ||d2[b]||^2 * ||a1[b]||^2      (outer-product identity)
#   ||dL/db2[b]||^2 = ||d2[b]||^2
#   ||dL/dW1[b]||^2 = ||g1[b]||^2 * ||x[b]||^2
#   ||dL/db1[b]||^2 = ||g1[b]||^2
# ----------------------------------------------------------------------------
def _trace_fim_fused_kernel(x_ref, gum_ref, w1t_ref, b1_ref, w2t_ref, w2_ref,
                            b2_ref, traces_ref, y_ref):
    i = pl.program_id(1)                     # per-core batch-tile ("arbitrary")

    @pl.when(i == 0)
    def _():                                  # zero this core's accumulator row
        traces_ref[...] = jnp.zeros_like(traces_ref)

    x16 = x_ref[...]                          # (tb, D) bf16
    tb = x16.shape[0]
    C = w2t_ref.shape[1]

    # --- forward (bf16 operands, f32 accumulate on the MXU) -----------------
    z1 = jnp.dot(x16, w1t_ref[...],
                 preferred_element_type=jnp.float32) + b1_ref[...]       # (tb, H) f32
    a1 = jnp.maximum(z1, 0.0)
    logits = jnp.dot(a1.astype(jnp.bfloat16), w2t_ref[...],
                     preferred_element_type=jnp.float32) + b2_ref[...]   # (tb, C) f32

    # --- sample y ~ Categorical(logits) via Gumbel-max (noise from wrapper) --
    noisy = logits + gum_ref[...]
    row_max = jnp.max(noisy, axis=-1, keepdims=True)
    lane = lax.broadcasted_iota(jnp.int32, (tb, C), 1)
    y_col = jnp.min(jnp.where(noisy == row_max, lane, C),
                    axis=-1, keepdims=True)                              # (tb, 1) int32
    yoh = (lane == y_col).astype(jnp.float32)                            # (tb, C) one-hot

    # Lane-dense label row: (tb,1) -> (1,tb) via a tiny NT matmul on the MXU
    # (avoids an XLU relayout and masked single-lane stores).
    lane_row = lax.broadcasted_iota(jnp.int32, (1, C), 1).astype(jnp.float32)
    y_row = lax.dot_general(lane_row, yoh, (((1,), (1,)), ((), ())),
                            preferred_element_type=jnp.float32)          # (1, tb)
    y_ref[...] = y_row.astype(jnp.int32).reshape(1, 1, tb)

    # --- softmax (exact reciprocal: this is a verification metric) ----------
    m = jnp.max(logits, axis=-1, keepdims=True)
    e = jnp.exp(logits - m)
    p = e / jnp.sum(e, axis=-1, keepdims=True)
    d2 = p - yoh                                                         # (tb, C)

    # --- backprop to hidden pre-activations ---------------------------------
    g1 = jnp.dot(d2.astype(jnp.bfloat16), w2_ref[...],
                 preferred_element_type=jnp.float32)                     # (tb, H)
    g1 = g1 * (z1 > 0.0).astype(jnp.float32)

    # --- per-sample squared norms (f32) --------------------------------------
    xf = x16.astype(jnp.float32)
    d2_sq = jnp.sum(d2 * d2, axis=-1, keepdims=True)                     # (tb, 1)
    a1_sq = jnp.sum(a1 * a1, axis=-1, keepdims=True)
    g1_sq = jnp.sum(g1 * g1, axis=-1, keepdims=True)
    x_sq = jnp.sum(xf * xf, axis=-1, keepdims=True)

    # Fused trace reduction: lanes 0..3 of one (tb,128) slab carry the four
    # per-sample contributions [w1, b1, w2, b2]; a single cross-sublane sum
    # accumulates into the resident (1,1,128) slab.
    lane128 = lax.broadcasted_iota(jnp.int32, (tb, 128), 1)
    per_sample = (jnp.where(lane128 == 0, g1_sq * x_sq, 0.0)
                  + jnp.where(lane128 == 1, g1_sq, 0.0)
                  + jnp.where(lane128 == 2, d2_sq * a1_sq, 0.0)
                  + jnp.where(lane128 == 3, d2_sq, 0.0))                 # (tb, 128)
    traces_ref[...] += jnp.sum(per_sample, axis=0, keepdims=True).reshape(1, 1, 128)


# ----------------------------------------------------------------------------
# VMEM budgeting helpers.
# ----------------------------------------------------------------------------
def _pick_tile_b(per_core_batch, D, H, C, vmem_budget_bytes):
    """Largest batch tile (multiple of 8, divides the per-core batch) in budget."""
    row_bytes = (2 * 2 * D                      # double-buffered bf16 x tile
                 + 2 * 4 * C                    # double-buffered f32 gumbel tile
                 + 4                            # int32 label
                 + 6 * 4 * max(D, H, 128))      # live f32 temporaries (z1,a1,g1,p,slab)
    cap = max(8, int(vmem_budget_bytes) // row_bytes)
    if per_core_batch <= cap:
        return per_core_batch
    t = (min(per_core_batch, cap) // 8) * 8
    while t >= 8:
        if per_core_batch % t == 0:
            return t
        t -= 8
    return per_core_batch


def _vmem_limit_bytes(tile_b, D, H, C):
    weights = 2 * (D * H + 2 * H * C) + 4 * (H + C)
    tiles = tile_b * (2 * D + 4 * C + 4)
    temps = 8 * 4 * tile_b * max(D, H, 128)
    need = 2 * (weights + tiles) + temps
    return int(min(128 * 1024 * 1024, max(32 * 1024 * 1024, 2 * need)))


# ----------------------------------------------------------------------------
# pallas_call wrapper.
# ----------------------------------------------------------------------------
def trace_fim_call(x16, gumbel, w1t, b1_row, w2t, w2, b2_row, *,
                   num_cores=2, tile_b=None, single_buffer_weights=False,
                   vmem_budget_bytes=16 * 1024 * 1024):
    """Returns ((num_cores,1,128) trace-sum slab, (n_tiles,1,tile_b) labels)."""
    B, D = x16.shape
    H = w1t.shape[1]
    C = w2t.shape[1]

    # Megacore split (v7x has 2 TensorCores; harmless 2-iteration loop elsewhere).
    if num_cores < 1 or B % num_cores != 0 or (num_cores > 1 and (B // num_cores) % 8 != 0):
        num_cores = 1
    per_core = B // num_cores
    if tile_b is None:
        tile_b = _pick_tile_b(per_core, D, H, C, vmem_budget_bytes)
    assert per_core % tile_b == 0, "per-core batch must be divisible by the batch tile"
    tiles_per_core = per_core // tile_b
    n_tiles = num_cores * tiles_per_core

    def _tile_idx(c, i):
        return (c * tiles_per_core + i, 0)

    def _w_spec(shape):
        idx = lambda c, i: (0,) * len(shape)
        if single_buffer_weights:
            # Constant-index residents: 1 buffer instead of the default 2
            # (enable at production D/H/C to halve resident-weight VMEM).
            return pl.BlockSpec(shape, idx, pipeline_mode=pl.Buffered(1))
        return pl.BlockSpec(shape, idx)

    grid_spec = pltpu.PrefetchScalarGridSpec(
        num_scalar_prefetch=0,
        grid=(num_cores, tiles_per_core),
        in_specs=[
            pl.BlockSpec((tile_b, D), _tile_idx),      # x batch tile (bf16)
            pl.BlockSpec((tile_b, C), _tile_idx),      # Gumbel noise tile (f32)
            _w_spec((D, H)),                           # W1^T (resident, bf16)
            _w_spec((1, H)),                           # b1   (f32)
            _w_spec((H, C)),                           # W2^T (forward, bf16)
            _w_spec((C, H)),                           # W2   (backward, bf16)
            _w_spec((1, C)),                           # b2   (f32)
        ],
        out_specs=(
            # Per-core resident trace accumulator row (lanes 0..3 = w1,b1,w2,b2).
            pl.BlockSpec((1, 1, 128), lambda c, i: (c, 0, 0)),
            # Lane-dense sampled-label rows, one per batch tile.
            pl.BlockSpec((1, 1, tile_b), lambda c, i: (c * tiles_per_core + i, 0, 0)),
        ),
    )
    return pl.pallas_call(
        _trace_fim_fused_kernel,
        grid_spec=grid_spec,
        out_shape=(jax.ShapeDtypeStruct((num_cores, 1, 128), jnp.float32),
                   jax.ShapeDtypeStruct((n_tiles, 1, tile_b), jnp.int32)),
        compiler_params=pltpu.CompilerParams(
            dimension_semantics=("parallel", "arbitrary"),
            vmem_limit_bytes=_vmem_limit_bytes(tile_b, D, H, C)),
    )(x16, gumbel, w1t, b1_row, w2t, w2, b2_row)


# ----------------------------------------------------------------------------
# Wrapper reproducing TraceFIMverification.forward(step) semantics.
# ----------------------------------------------------------------------------
def trace_fim_forward(step, x_held_out, params, key, *, num_cores=2):
    w1, b1, w2, b2 = params["w1"], params["b1"], params["w2"], params["b2"]
    B = x_held_out.shape[0]
    C = w2.shape[0]

    # y ~ Categorical(logits = model(x)) via Gumbel-max: noise generated
    # wrapper-side (hardware PRNG has no CPU/interpret lowering); the argmax
    # over (logits + gumbel) runs in-kernel on the single fused forward pass.
    gumbel = jax.random.gumbel(key, (B, C), dtype=jnp.float32)

    # Wrapper-side layout/dtype plumbing: pre-transpose weights so every
    # in-kernel matmul contracts (last, first); cast matmul operands to bf16.
    x16 = x_held_out.astype(jnp.bfloat16)
    w1t = jnp.transpose(w1).astype(jnp.bfloat16)
    w2t = jnp.transpose(w2).astype(jnp.bfloat16)
    w2b = w2.astype(jnp.bfloat16)
    b1_row = b1.reshape(1, -1).astype(jnp.float32)
    b2_row = b2.reshape(1, -1).astype(jnp.float32)

    traces_slab, y_tiles = trace_fim_call(
        x16, gumbel, w1t, b1_row, w2t, w2b, b2_row, num_cores=num_cores)

    # Tiny on-device epilogue; no forced host sync / float() readback here —
    # return device scalars so a training loop can log them asynchronously.
    tr = jnp.sum(traces_slab, axis=(0, 1)) / jnp.float32(B)        # (128,)
    overall = tr[0] + tr[1] + tr[2] + tr[3]
    evaluators = {
        "trace_fim/w1": tr[0],
        "trace_fim/b1": tr[1],
        "trace_fim/w2": tr[2],
        "trace_fim/b2": tr[3],
        "trace_fim/overall_trace": overall,
        "steps/trace_fim": step,
    }
    # TODO(synk): self.logger.log_scalars(evaluators, step) — no logging backend here.
    y_sampled = y_tiles.reshape(-1)                                # (B,)
    return evaluators, y_sampled


# ----------------------------------------------------------------------------
# Pure-JAX reference: vmap(grad(...)) like the original torch.func path,
# evaluated with the SAME labels the kernel sampled and the same bf16-rounded
# matmul inputs.
# ----------------------------------------------------------------------------
def _ref_traces(x, params, y_sampled):
    rnd = lambda a: a.astype(jnp.bfloat16).astype(jnp.float32)
    p32 = {"w1": rnd(params["w1"]), "b1": params["b1"].astype(jnp.float32),
           "w2": rnd(params["w2"]), "b2": params["b2"].astype(jnp.float32)}
    xr = rnd(x)

    def apply_model(p, xb):
        z1 = xb @ p["w1"].T + p["b1"]
        a1 = jnp.maximum(z1, 0.0)
        return a1 @ p["w2"].T + p["b2"]

    def per_sample_loss(p, xi, yi):
        logits = apply_model(p, xi[None, :])
        return -jax.nn.log_softmax(logits, axis=-1)[0, yi]

    grads = jax.vmap(jax.grad(per_sample_loss), in_axes=(None, 0, 0))(p32, xr, y_sampled)
    B = x.shape[0]
    return {k: jnp.sum(v * v) / B for k, v in grads.items()}


if __name__ == "__main__":
    B, D, H, C = 16, 32, 32, 16

    key = jax.random.PRNGKey(0)
    kx, kw1, kb1, kw2, kb2, ks = jax.random.split(key, 6)

    x_held_out = jax.random.normal(kx, (B, D), dtype=jnp.float32)
    params = {
        "w1": 0.2 * jax.random.normal(kw1, (H, D), dtype=jnp.float32),
        "b1": 0.1 * jax.random.normal(kb1, (H,), dtype=jnp.float32),
        "w2": 0.2 * jax.random.normal(kw2, (C, H), dtype=jnp.float32),
        "b2": 0.1 * jax.random.normal(kb2, (C,), dtype=jnp.float32),
    }

    evaluators, y_sampled = trace_fim_forward(
        step=0, x_held_out=x_held_out, params=params, key=ks, num_cores=2)
    jax.block_until_ready((evaluators["trace_fim/overall_trace"], y_sampled))

    # Verify against the vmap(grad(...)) reference on the kernel-sampled labels.
    ref = _ref_traces(x_held_out, params, y_sampled)
    ref_overall = ref["w1"] + ref["b1"] + ref["w2"] + ref["b2"]
    got = np.array([float(evaluators["trace_fim/w1"]), float(evaluators["trace_fim/b1"]),
                    float(evaluators["trace_fim/w2"]), float(evaluators["trace_fim/b2"]),
                    float(evaluators["trace_fim/overall_trace"])])
    want = np.array([float(ref["w1"]), float(ref["b1"]), float(ref["w2"]),
                     float(ref["b2"]), float(ref_overall)])
    # Kernel casts a1/d2 to bf16 at the dot sites (f32 accumulate); the f32
    # reference on bf16-rounded inputs therefore differs at the ~1% level.
    assert np.allclose(got, want, rtol=5e-2, atol=1e-5), (got, want)

    # Sampled labels must be valid class indices.
    y_np = np.asarray(y_sampled)
    assert y_np.shape == (B,) and y_np.min() >= 0 and y_np.max() < C

    print("KERNEL_OK")
</pallas_src>

<mosaic_0001>
module attributes {stable_mosaic.version = 11 : i64} {
  func.func @_trace_fim_fused_kernel(%arg0: i32, %arg1: i32, %arg2: memref<8x32xbf16, #tpu.memory_space<vmem>>, %arg3: memref<8x16xf32, #tpu.memory_space<vmem>>, %arg4: memref<32x32xbf16, #tpu.memory_space<vmem>>, %arg5: memref<1x32xf32, #tpu.memory_space<vmem>>, %arg6: memref<32x16xbf16, #tpu.memory_space<vmem>>, %arg7: memref<16x32xbf16, #tpu.memory_space<vmem>>, %arg8: memref<1x16xf32, #tpu.memory_space<vmem>>, %arg9: memref<1x1x128xf32, #tpu.memory_space<vmem>>, %arg10: memref<1x1x8xi32, #tpu.memory_space<vmem>>) attributes {dimension_semantics = [#tpu.dimension_semantics<parallel>, #tpu.dimension_semantics<arbitrary>], iteration_bounds = array<i64: 2, 1>, scalar_prefetch = 0 : i64, scratch_operands = 0 : i64, tpu.core_type = #tpu.core_type<tc>, window_params = [{transform_indices = @transform_0, window_bounds = array<i64: 8, 32>}, {transform_indices = @transform_1, window_bounds = array<i64: 8, 16>}, {pipeline_mode = #tpu.pipeline_mode<synchronous>, transform_indices = @transform_2, window_bounds = array<i64: 32, 32>}, {pipeline_mode = #tpu.pipeline_mode<synchronous>, transform_indices = @transform_3, window_bounds = array<i64: 1, 32>}, {pipeline_mode = #tpu.pipeline_mode<synchronous>, transform_indices = @transform_4, window_bounds = array<i64: 32, 16>}, {pipeline_mode = #tpu.pipeline_mode<synchronous>, transform_indices = @transform_5, window_bounds = array<i64: 16, 32>}, {pipeline_mode = #tpu.pipeline_mode<synchronous>, transform_indices = @transform_6, window_bounds = array<i64: 1, 16>}, {transform_indices = @transform_7, window_bounds = array<i64: 1, 1, 128>}, {transform_indices = @transform_8, window_bounds = array<i64: 1, 1, 8>}]} {
    %c0_i32 = arith.constant 0 : i32
    %0 = arith.cmpi eq, %arg1, %c0_i32 : i32
    %1 = arith.extui %0 : i1 to i32
    %c0_i32_0 = arith.constant 0 : i32
    %2 = arith.cmpi ne, %1, %c0_i32_0 : i32
    scf.if %2 {
      %cst_42 = arith.constant 0.000000e+00 : f32
      %105 = vector.broadcast %cst_42 : f32 to vector<1x1x128xf32>
      %c0_43 = arith.constant 0 : index
      %c0_44 = arith.constant 0 : index
      %c0_45 = arith.constant 0 : index
      %106 = vector.load %arg9[%c0_43, %c0_44, %c0_45] : memref<1x1x128xf32, #tpu.memory_space<vmem>>, vector<1x1x128xf32>
      tpu.vector_store %arg9[%c0_43, %c0_44, %c0_45], %105 {strides = array<i32>} : memref<1x1x128xf32, #tpu.memory_space<vmem>>, vector<1x1x128xf32>,
    } else {
    }
    %c0 = arith.constant 0 : index
    %c0_1 = arith.constant 0 : index
    %3 = vector.load %arg2[%c0, %c0_1] : memref<8x32xbf16, #tpu.memory_space<vmem>>, vector<8x32xbf16>
    %c0_2 = arith.constant 0 : index
    %c0_3 = arith.constant 0 : index
    %4 = vector.load %arg4[%c0_2, %c0_3] : memref<32x32xbf16, #tpu.memory_space<vmem>>, vector<32x32xbf16>
    %cst = arith.constant dense<0.000000e+00> : vector<8x32xf32>
    %5 = tpu.matmul %3, %4, %cst {dimension_numbers = #tpu.dot_dimension_numbers<[1], [0], [0], [1], [0, 0, 1, 1], [], []>} : vector<8x32xbf16>, vector<32x32xbf16>, vector<8x32xf32> -> vector<8x32xf32>
    %c0_4 = arith.constant 0 : index
    %c0_5 = arith.constant 0 : index
    %6 = vector.load %arg5[%c0_4, %c0_5] : memref<1x32xf32, #tpu.memory_space<vmem>>, vector<1x32xf32>
    %7 = vector.broadcast %6 : vector<1x32xf32> to vector<8x32xf32>
    %8 = arith.addf %5, %7 : vector<8x32xf32>
    %cst_6 = arith.constant 0.000000e+00 : f32
    %9 = vector.broadcast %cst_6 : f32 to vector<8x32xf32>
    %10 = arith.maximumf %8, %9 : vector<8x32xf32>
    %11 = arith.truncf %10 : vector<8x32xf32> to vector<8x32xbf16>
    %c0_7 = arith.constant 0 : index
    %c0_8 = arith.constant 0 : index
    %12 = vector.load %arg6[%c0_7, %c0_8] : memref<32x16xbf16, #tpu.memory_space<vmem>>, vector<32x16xbf16>
    %cst_9 = arith.constant dense<0.000000e+00> : vector<8x16xf32>
    %13 = tpu.matmul %11, %12, %cst_9 {dimension_numbers = #tpu.dot_dimension_numbers<[1], [0], [0], [1], [0, 0, 1, 1], [], []>} : vector<8x32xbf16>, vector<32x16xbf16>, vector<8x16xf32> -> vector<8x16xf32>
    %c0_10 = arith.constant 0 : index
    %c0_11 = arith.constant 0 : index
    %14 = vector.load %arg8[%c0_10, %c0_11] : memref<1x16xf32, #tpu.memory_space<vmem>>, vector<1x16xf32>
    %15 = vector.broadcast %14 : vector<1x16xf32> to vector<8x16xf32>
    %16 = arith.addf %13, %15 : vector<8x16xf32>
    %c0_12 = arith.constant 0 : index
    %c0_13 = arith.constant 0 : index
    %17 = vector.load %arg3[%c0_12, %c0_13] : memref<8x16xf32, #tpu.memory_space<vmem>>, vector<8x16xf32>
    %18 = arith.addf %16, %17 : vector<8x16xf32>
    %cst_14 = arith.constant dense<0xFF800000> : vector<8xf32>
    %19 = vector.multi_reduction <maximumf>, %18, %cst_14 [1] : vector<8x16xf32> to vector<8xf32>
    %20 = vector.shape_cast %19 : vector<8xf32> to vector<8x1xf32>
    %21 = tpu.iota {dimensions = array<i32: 1>} : vector<8x16xi32>
    %22 = vector.broadcast %20 : vector<8x1xf32> to vector<8x16xf32>
    %23 = arith.cmpf oeq, %18, %22 : vector<8x16xf32>
    %c16_i32 = arith.constant 16 : i32
    %24 = vector.broadcast %c16_i32 : i32 to vector<8x16xi32>
    %25 = arith.select %23, %21, %24 : vector<8x16xi1>, vector<8x16xi32>
    %cst_15 = arith.constant dense<2147483647> : vector<8xi32>
    %26 = vector.multi_reduction <minsi>, %25, %cst_15 [1] : vector<8x16xi32> to vector<8xi32>
    %27 = vector.shape_cast %26 : vector<8xi32> to vector<8x1xi32>
    %28 = vector.broadcast %27 : vector<8x1xi32> to vector<8x16xi32>
    %29 = arith.cmpi eq, %21, %28 : vector<8x16xi32>
    %30 = arith.extui %29 : vector<8x16xi1> to vector<8x16xi32>
    %31 = arith.sitofp %30 : vector<8x16xi32> to vector<8x16xf32>
    %32 = tpu.iota {dimensions = array<i32: 1>} : vector<1x16xi32>
    %33 = arith.sitofp %32 : vector<1x16xi32> to vector<1x16xf32>
    %cst_16 = arith.constant dense<0.000000e+00> : vector<1x8xf32>
    %34 = tpu.matmul %33, %31, %cst_16 {dimension_numbers = #tpu.dot_dimension_numbers<[1], [1], [0], [0], [0, 0, 1, 0], [], []>} : vector<1x16xf32>, vector<8x16xf32>, vector<1x8xf32> -> vector<1x8xf32>
    %35 = arith.fptosi %34 : vector<1x8xf32> to vector<1x8xi32>
    %36 = vector.shape_cast %35 : vector<1x8xi32> to vector<1x1x8xi32>
    %c0_17 = arith.constant 0 : index
    %c0_18 = arith.constant 0 : index
    %c0_19 = arith.constant 0 : index
    %37 = vector.load %arg10[%c0_17, %c0_18, %c0_19] : memref<1x1x8xi32, #tpu.memory_space<vmem>>, vector<1x1x8xi32>
    tpu.vector_store %arg10[%c0_17, %c0_18, %c0_19], %36 {strides = array<i32>} : memref<1x1x8xi32, #tpu.memory_space<vmem>>, vector<1x1x8xi32>,
    %cst_20 = arith.constant dense<0xFF800000> : vector<8xf32>
    %38 = vector.multi_reduction <maximumf>, %16, %cst_20 [1] : vector<8x16xf32> to vector<8xf32>
    %39 = vector.shape_cast %38 : vector<8xf32> to vector<8x1xf32>
    %40 = vector.broadcast %39 : vector<8x1xf32> to vector<8x16xf32>
    %41 = arith.subf %16, %40 : vector<8x16xf32>
    %42 = math.exp %41 : vector<8x16xf32>
    %cst_21 = arith.constant dense<0.000000e+00> : vector<8xf32>
    %43 = vector.multi_reduction <add>, %42, %cst_21 [1] : vector<8x16xf32> to vector<8xf32>
    %44 = vector.shape_cast %43 : vector<8xf32> to vector<8x1xf32>
    %45 = vector.broadcast %44 : vector<8x1xf32> to vector<8x16xf32>
    %46 = arith.divf %42, %45 : vector<8x16xf32>
    %47 = arith.subf %46, %31 : vector<8x16xf32>
    %48 = arith.truncf %47 : vector<8x16xf32> to vector<8x16xbf16>
    %c0_22 = arith.constant 0 : index
    %c0_23 = arith.constant 0 : index
    %49 = vector.load %arg7[%c0_22, %c0_23] : memref<16x32xbf16, #tpu.memory_space<vmem>>, vector<16x32xbf16>
    %cst_24 = arith.constant dense<0.000000e+00> : vector<8x32xf32>
    %50 = tpu.matmul %48, %49, %cst_24 {dimension_numbers = #tpu.dot_dimension_numbers<[1], [0], [0], [1], [0, 0, 1, 1], [], []>} : vector<8x16xbf16>, vector<16x32xbf16>, vector<8x32xf32> -> vector<8x32xf32>
    %cst_25 = arith.constant 0.000000e+00 : f32
    %51 = vector.broadcast %cst_25 : f32 to vector<8x32xf32>
    %52 = arith.cmpf ogt, %8, %51 : vector<8x32xf32>
    %53 = arith.extui %52 : vector<8x32xi1> to vector<8x32xi32>
    %54 = arith.sitofp %53 : vector<8x32xi32> to vector<8x32xf32>
    %55 = arith.mulf %50, %54 : vector<8x32xf32>
    %56 = arith.extf %3 : vector<8x32xbf16> to vector<8x32xf32>
    %57 = arith.mulf %47, %47 : vector<8x16xf32>
    %cst_26 = arith.constant dense<0.000000e+00> : vector<8xf32>
    %58 = vector.multi_reduction <add>, %57, %cst_26 [1] : vector<8x16xf32> to vector<8xf32>
    %59 = vector.shape_cast %58 : vector<8xf32> to vector<8x1xf32>
    %60 = arith.mulf %10, %10 : vector<8x32xf32>
    %cst_27 = arith.constant dense<0.000000e+00> : vector<8xf32>
    %61 = vector.multi_reduction <add>, %60, %cst_27 [1] : vector<8x32xf32> to vector<8xf32>
    %62 = vector.shape_cast %61 : vector<8xf32> to vector<8x1xf32>
    %63 = arith.mulf %55, %55 : vector<8x32xf32>
    %cst_28 = arith.constant dense<0.000000e+00> : vector<8xf32>
    %64 = vector.multi_reduction <add>, %63, %cst_28 [1] : vector<8x32xf32> to vector<8xf32>
    %65 = vector.shape_cast %64 : vector<8xf32> to vector<8x1xf32>
    %66 = arith.mulf %56, %56 : vector<8x32xf32>
    %cst_29 = arith.constant dense<0.000000e+00> : vector<8xf32>
    %67 = vector.multi_reduction <add>, %66, %cst_29 [1] : vector<8x32xf32> to vector<8xf32>
    %68 = vector.shape_cast %67 : vector<8xf32> to vector<8x1xf32>
    %69 = tpu.iota {dimensions = array<i32: 1>} : vector<8x128xi32>
    %c0_i32_30 = arith.constant 0 : i32
    %70 = vector.broadcast %c0_i32_30 : i32 to vector<8x128xi32>
    %71 = arith.cmpi eq, %69, %70 : vector<8x128xi32>
    %72 = arith.mulf %65, %68 : vector<8x1xf32>
    %cst_31 = arith.constant 0.000000e+00 : f32
    %73 = vector.shape_cast %72 : vector<8x1xf32> to vector<8x1xf32>
    %74 = vector.broadcast %73 : vector<8x1xf32> to vector<8x128xf32>
    %75 = vector.broadcast %cst_31 : f32 to vector<8x128xf32>
    %76 = arith.select %71, %74, %75 : vector<8x128xi1>, vector<8x128xf32>
    %c1_i32 = arith.constant 1 : i32
    %77 = vector.broadcast %c1_i32 : i32 to vector<8x128xi32>
    %78 = arith.cmpi eq, %69, %77 : vector<8x128xi32>
    %cst_32 = arith.constant 0.000000e+00 : f32
    %79 = vector.shape_cast %65 : vector<8x1xf32> to vector<8x1xf32>
    %80 = vector.broadcast %79 : vector<8x1xf32> to vector<8x128xf32>
    %81 = vector.broadcast %cst_32 : f32 to vector<8x128xf32>
    %82 = arith.select %78, %80, %81 : vector<8x128xi1>, vector<8x128xf32>
    %83 = arith.addf %76, %82 : vector<8x128xf32>
    %c2_i32 = arith.constant 2 : i32
    %84 = vector.broadcast %c2_i32 : i32 to vector<8x128xi32>
    %85 = arith.cmpi eq, %69, %84 : vector<8x128xi32>
    %86 = arith.mulf %59, %62 : vector<8x1xf32>
    %cst_33 = arith.constant 0.000000e+00 : f32
    %87 = vector.shape_cast %86 : vector<8x1xf32> to vector<8x1xf32>
    %88 = vector.broadcast %87 : vector<8x1xf32> to vector<8x128xf32>
    %89 = vector.broadcast %cst_33 : f32 to vector<8x128xf32>
    %90 = arith.select %85, %88, %89 : vector<8x128xi1>, vector<8x128xf32>
    %91 = arith.addf %83, %90 : vector<8x128xf32>
    %c3_i32 = arith.constant 3 : i32
    %92 = vector.broadcast %c3_i32 : i32 to vector<8x128xi32>
    %93 = arith.cmpi eq, %69, %92 : vector<8x128xi32>
    %cst_34 = arith.constant 0.000000e+00 : f32
    %94 = vector.shape_cast %59 : vector<8x1xf32> to vector<8x1xf32>
    %95 = vector.broadcast %94 : vector<8x1xf32> to vector<8x128xf32>
    %96 = vector.broadcast %cst_34 : f32 to vector<8x128xf32>
    %97 = arith.select %93, %95, %96 : vector<8x128xi1>, vector<8x128xf32>
    %98 = arith.addf %91, %97 : vector<8x128xf32>
    %c0_35 = arith.constant 0 : index
    %c0_36 = arith.constant 0 : index
    %c0_37 = arith.constant 0 : index
    %99 = vector.load %arg9[%c0_35, %c0_36, %c0_37] : memref<1x1x128xf32, #tpu.memory_space<vmem>>, vector<1x1x128xf32>
    %cst_38 = arith.constant dense<0.000000e+00> : vector<128xf32>
    %100 = vector.multi_reduction <add>, %98, %cst_38 [0] : vector<8x128xf32> to vector<128xf32>
    %101 = vector.shape_cast %100 : vector<128xf32> to vector<1x128xf32>
    %102 = vector.shape_cast %101 : vector<1x128xf32> to vector<1x1x128xf32>
    %103 = arith.addf %99, %102 : vector<1x1x128xf32>
    %c0_39 = arith.constant 0 : index
    %c0_40 = arith.constant 0 : index
    %c0_41 = arith.constant 0 : index
    %104 = vector.load %arg9[%c0_39, %c0_40, %c0_41] : memref<1x1x128xf32, #tpu.memory_space<vmem>>, vector<1x1x128xf32>
    tpu.vector_store %arg9[%c0_39, %c0_40, %c0_41], %103 {strides = array<i32>} : memref<1x1x128xf32, #tpu.memory_space<vmem>>, vector<1x1x128xf32>,
    return
  }
  func.func @transform_0(%arg0: i32, %arg1: i32) -> (i32, i32) {
    %c1_i32 = arith.constant 1 : i32
    %0 = arith.muli %arg0, %c1_i32 : i32
    %1 = arith.addi %0, %arg1 : i32
    %c0_i32 = arith.constant 0 : i32
    %c0_i32_0 = arith.constant 0 : i32
    return %1, %c0_i32 : i32, i32
  }
  func.func @transform_1(%arg0: i32, %arg1: i32) -> (i32, i32) {
    %c1_i32 = arith.constant 1 : i32
    %0 = arith.muli %arg0, %c1_i32 : i32
    %1 = arith.addi %0, %arg1 : i32
    %c0_i32 = arith.constant 0 : i32
    %c0_i32_0 = arith.constant 0 : i32
    return %1, %c0_i32 : i32, i32
  }
  func.func @transform_2(%arg0: i32, %arg1: i32) -> (i32, i32) {
    %c0_i32 = arith.constant 0 : i32
    %c0_i32_0 = arith.constant 0 : i32
    %c0_i32_1 = arith.constant 0 : i32
    return %c0_i32, %c0_i32_0 : i32, i32
  }
  func.func @transform_3(%arg0: i32, %arg1: i32) -> (i32, i32) {
    %c0_i32 = arith.constant 0 : i32
    %c0_i32_0 = arith.constant 0 : i32
    %c0_i32_1 = arith.constant 0 : i32
    return %c0_i32, %c0_i32_0 : i32, i32
  }
  func.func @transform_4(%arg0: i32, %arg1: i32) -> (i32, i32) {
    %c0_i32 = arith.constant 0 : i32
    %c0_i32_0 = arith.constant 0 : i32
    %c0_i32_1 = arith.constant 0 : i32
    return %c0_i32, %c0_i32_0 : i32, i32
  }
  func.func @transform_5(%arg0: i32, %arg1: i32) -> (i32, i32) {
    %c0_i32 = arith.constant 0 : i32
    %c0_i32_0 = arith.constant 0 : i32
    %c0_i32_1 = arith.constant 0 : i32
    return %c0_i32, %c0_i32_0 : i32, i32
  }
  func.func @transform_6(%arg0: i32, %arg1: i32) -> (i32, i32) {
    %c0_i32 = arith.constant 0 : i32
    %c0_i32_0 = arith.constant 0 : i32
    %c0_i32_1 = arith.constant 0 : i32
    return %c0_i32, %c0_i32_0 : i32, i32
  }
  func.func @transform_7(%arg0: i32, %arg1: i32) -> (i32, i32, i32) {
    %c0_i32 = arith.constant 0 : i32
    %c0_i32_0 = arith.constant 0 : i32
    %c0_i32_1 = arith.constant 0 : i32
    return %arg0, %c0_i32, %c0_i32_0 : i32, i32, i32
  }
  func.func @transform_8(%arg0: i32, %arg1: i32) -> (i32, i32, i32) {
    %c1_i32 = arith.constant 1 : i32
    %0 = arith.muli %arg0, %c1_i32 : i32
    %1 = arith.addi %0, %arg1 : i32
    %c0_i32 = arith.constant 0 : i32
    %c0_i32_0 = arith.constant 0 : i32
    %c0_i32_1 = arith.constant 0 : i32
    return %1, %c0_i32, %c0_i32_0 : i32, i32, i32
  }
}

</mosaic_0001>

<llo_original>
// kernel: tpu_custom_call.1
$region0: #{tpu_custom_call.1}
  #allocation0 [shape = 'u32[]', space=smem, size = 0x4, offset = 0x4, fixed_abs, tag = 'smem constant byte address 0x4 - core index']
  #allocation1 [shape = 'u32[144,128]{1,0:T(1,128)}', space=vmem, size = 0x12000, scoped, tag = 'internal scratch']
  %s0 = inlined_call_operand.vmem [shape: bf16[16,32], index: 0, kind: input, shape index: {}]
  %s1 = inlined_call_operand.vmem [shape: f32[16,16], index: 1, kind: input, shape index: {}]
  %s2 = inlined_call_operand.hbm [shape: bf16[32,32], index: 2, kind: input, shape index: {}]
  %s3 = inlined_call_operand.vmem [shape: f32[1,32], index: 3, kind: input, shape index: {}]
  %s4 = inlined_call_operand.vmem [shape: bf16[32,16], index: 4, kind: input, shape index: {}]
  %s5 = inlined_call_operand.vmem [shape: bf16[16,32], index: 5, kind: input, shape index: {}]
  %s6 = inlined_call_operand.vmem [shape: f32[1,16], index: 6, kind: input, shape index: {}]
  %s7 = inlined_call_operand.hbm [shape: f32[2,1,128], index: 7, kind: output, shape index: {0}]
  %s8 = inlined_call_operand.hbm [shape: s32[2,1,8], index: 8, kind: output, shape index: {1}]
  %9 = xla_tuple %s7, %s8
  %s10 = sld [smem:[#allocation0]]
  $region77: #{tpu_custom_call.1} parent=0
    _
  %s12 = ssub.s32 1, %s10
  %s13 = scalar_select 0, %s12, %s10
  $region1: #{tpu_custom_call.1} parent=0
    #allocation2 [shape = 'u8[8192]{0}', space=vmem, size = 0x2000, scoped, tag = 'input window, operand 2, single buffered']
    #allocation3 [shape = 's32[2]{0}', space=sflag, size = 0x8, scoped, tag = 'scoped memory for tpu_custom_call.1']
    #allocation4 [shape = 's32[2]{0}', space=sflag, size = 0x8, scoped, tag = 'scoped memory for tpu_custom_call.1']
    #allocation5 [shape = 'u8[1024]{0}', space=vmem, size = 0x400, scoped, tag = 'output window, operand 0']
    #allocation6 [shape = 'u8[1024]{0}', space=vmem, size = 0x400, scoped, tag = 'output window, operand 1']
    #allocation7 [shape = 's32[2]{0}', space=sflag, size = 0x8, scoped, tag = 'scoped memory for tpu_custom_call.1']
    %14 = vsyncpa [#allocation3], 0
    %15 = vsyncpa [#allocation4], 0
    %s16 = scalar_lea.sflag [#allocation4], 1
    %17 = vsyncpa %s16, 0
    %18 = vsyncpa [#allocation7], 0
    %s19 = scalar_lea.sflag [#allocation7], 1
    %20 = vsyncpa %s19, 0
    loop: start=0, step=1, limit=4
    $region2: #{tpu_custom_call.1} parent=1 // loop_pre_header
      _
    $region3: #{tpu_custom_call.1} parent=1 // loop_header
      %s22 = sphi 0, %s26
      %p23 = scmp.ge.s32.totalorder %s22, 4
      %s29 = sphi 0, %s41
      %s30 = sphi 0, %s37
      %s31 = sphi 0, %s29
      %s32 = sphi 0, %s30
      %s33 = sphi 0, %s31
      %s34 = sphi 0, %s32
      %s46 = sphi 0, %s48
      %s49 = sphi 0, %s46
      %s50 = sphi 0, %s49
      %s66 = sphi 0, %s50
      %s74 = sphi 0, %s76
      %s77 = sphi 0, %s74
      %s78 = sphi 0, %s77
      %s94 = sphi 0, %s78
      %s98 = sphi 0, %s98
      %s100 = sphi 0, %s98
      %s101 = sphi 0, %s100
      %s115 = sphi 0, %s101
      %s119 = sphi 0, %s119
      %s121 = sphi 0, %s119
      %s122 = sphi 0, %s121
      %s136 = sphi 0, %s122
      %s140 = sphi 0, %s140
      %s142 = sphi 0, %s140
      %s143 = sphi 0, %s142
      %s157 = sphi 0, %s143
      %s161 = sphi 0, %s161
      %s163 = sphi 0, %s161
      %s164 = sphi 0, %s163
      %s178 = sphi 0, %s164
      %s182 = sphi 0, %s182
      %s184 = sphi 0, %s182
      %s185 = sphi 0, %s184
      %s199 = sphi 0, %s185
      %s205 = sphi 0, %s207
      %s208 = sphi 0, %s205
      %s209 = sphi 0, %s208
      %s225 = sphi 0, %s209
      %s233 = sphi 0, %s235
      %s236 = sphi 0, %s233
      %s237 = sphi 0, %s236
      %s253 = sphi 0, %s237
    $region4: #{tpu_custom_call.1} parent=1 // loop_header_branch
      %25 = sbr.rel (%p23) target = $region8
    $region5: #{tpu_custom_call.1} parent=1 // loop_body
      %s27 = ssub.s32 %s22, 1
      %s28 = ssub.s32 %s22, 2
      %s35 = sadd.s32 1, %s30
      %p36 = scmp.ge.s32.totalorder %s35, 1
      %s37 = scalar_select %p36, 0, %s35
      %s38 = sadd.s32 1, %s29
      %s39 = scalar_select %p36, %s38, %s29
      %p40 = scmp.ge.s32.totalorder %s39, 2
      %s41 = scalar_select %p40, 0, %s39
      %s42 = sadd.s32 %s29, %s30
      %s43 = sadd.s32 %s41, %s37
      %s44 = ssub.s32 %s42, %s43
      %p45 = scmp.eq.s32.totalorder %s44, 0
      %s47 = sadd.s32 %s46, 1
      %s48 = scalar_select %p45, %s46, %s47
      %p51 = pneg %p45
      %p52 = scmp.eq.s32.totalorder %s22, 1
      %p53 = por %p51, %p52
      %p54 = scmp.ne.s32.totalorder %s46, %s49
      %p55 = scmp.eq.s32.totalorder %s22, 0
      %p56 = por %p54, %p55
      %p57 = scmp.ne.s32.totalorder %s46, %s49
      %p58 = scmp.eq.s32.totalorder %s27, 1
      %p59 = por %p57, %p58
      %p60 = scmp.ne.s32.totalorder %s49, %s50
      %p61 = scmp.eq.s32.totalorder %s27, 0
      %p62 = por %p60, %p61
      %p63 = scmp.ne.s32.totalorder %s49, %s50
      %p64 = scmp.eq.s32.totalorder %s28, 1
      %p65 = por %p63, %p64
      %p67 = scmp.ne.s32.totalorder %s50, %s66
      %p68 = scmp.eq.s32.totalorder %s28, 0
      %p69 = por %p67, %p68
      %s70 = sadd.s32 %s29, %s30
      %s71 = sadd.s32 %s41, %s37
      %s72 = ssub.s32 %s70, %s71
      %p73 = scmp.eq.s32.totalorder %s72, 0
      %s75 = sadd.s32 %s74, 1
      %s76 = scalar_select %p73, %s74, %s75
      %p79 = pneg %p73
      %p80 = scmp.eq.s32.totalorder %s22, 1
      %p81 = por %p79, %p80
      %p82 = scmp.ne.s32.totalorder %s74, %s77
      %p83 = scmp.eq.s32.totalorder %s22, 0
      %p84 = por %p82, %p83
      %p85 = scmp.ne.s32.totalorder %s74, %s77
      %p86 = scmp.eq.s32.totalorder %s27, 1
      %p87 = por %p85, %p86
      %p88 = scmp.ne.s32.totalorder %s77, %s78
      %p89 = scmp.eq.s32.totalorder %s27, 0
      %p90 = por %p88, %p89
      %p91 = scmp.ne.s32.totalorder %s77, %s78
      %p92 = scmp.eq.s32.totalorder %s28, 1
      %p93 = por %p91, %p92
      %p95 = scmp.ne.s32.totalorder %s78, %s94
      %p96 = scmp.eq.s32.totalorder %s28, 0
      %p97 = por %p95, %p96
      %s99 = sadd.s32 %s98, 1
      %p102 = scmp.eq.s32.totalorder %s22, 1
      %p103 = scmp.ne.s32.totalorder %s98, %s100
      %p104 = scmp.eq.s32.totalorder %s22, 0
      %p105 = por %p103, %p104
      %p106 = scmp.ne.s32.totalorder %s98, %s100
      %p107 = scmp.eq.s32.totalorder %s27, 1
      %p108 = por %p106, %p107
      %p109 = scmp.ne.s32.totalorder %s100, %s101
      %p110 = scmp.eq.s32.totalorder %s27, 0
      %p111 = por %p109, %p110
      %p112 = scmp.ne.s32.totalorder %s100, %s101
      %p113 = scmp.eq.s32.totalorder %s28, 1
      %p114 = por %p112, %p113
      %p116 = scmp.ne.s32.totalorder %s101, %s115
      %p117 = scmp.eq.s32.totalorder %s28, 0
      %p118 = por %p116, %p117
      %s120 = sadd.s32 %s119, 1
      %p123 = scmp.eq.s32.totalorder %s22, 1
      %p124 = scmp.ne.s32.totalorder %s119, %s121
      %p125 = scmp.eq.s32.totalorder %s22, 0
      %p126 = por %p124, %p125
      %p127 = scmp.ne.s32.totalorder %s119, %s121
      %p128 = scmp.eq.s32.totalorder %s27, 1
      %p129 = por %p127, %p128
      %p130 = scmp.ne.s32.totalorder %s121, %s122
      %p131 = scmp.eq.s32.totalorder %s27, 0
      %p132 = por %p130, %p131
      %p133 = scmp.ne.s32.totalorder %s121, %s122
      %p134 = scmp.eq.s32.totalorder %s28, 1
      %p135 = por %p133, %p134
      %p137 = scmp.ne.s32.totalorder %s122, %s136
      %p138 = scmp.eq.s32.totalorder %s28, 0
      %p139 = por %p137, %p138
      %s141 = sadd.s32 %s140, 1
      %p144 = scmp.eq.s32.totalorder %s22, 1
      %p145 = scmp.ne.s32.totalorder %s140, %s142
      %p146 = scmp.eq.s32.totalorder %s22, 0
      %p147 = por %p145, %p146
      %p148 = scmp.ne.s32.totalorder %s140, %s142
      %p149 = scmp.eq.s32.totalorder %s27, 1
      %p150 = por %p148, %p149
      %p151 = scmp.ne.s32.totalorder %s142, %s143
      %p152 = scmp.eq.s32.totalorder %s27, 0
      %p153 = por %p151, %p152
      %p154 = scmp.ne.s32.totalorder %s142, %s143
      %p155 = scmp.eq.s32.totalorder %s28, 1
      %p156 = por %p154, %p155
      %p158 = scmp.ne.s32.totalorder %s143, %s157
      %p159 = scmp.eq.s32.totalorder %s28, 0
      %p160 = por %p158, %p159
      %s162 = sadd.s32 %s161, 1
      %p165 = scmp.eq.s32.totalorder %s22, 1
      %p166 = scmp.ne.s32.totalorder %s161, %s163
      %p167 = scmp.eq.s32.totalorder %s22, 0
      %p168 = por %p166, %p167
      %p169 = scmp.ne.s32.totalorder %s161, %s163
      %p170 = scmp.eq.s32.totalorder %s27, 1
      %p171 = por %p169, %p170
      %p172 = scmp.ne.s32.totalorder %s163, %s164
      %p173 = scmp.eq.s32.totalorder %s27, 0
      %p174 = por %p172, %p173
      %p175 = scmp.ne.s32.totalorder %s163, %s164
      %p176 = scmp.eq.s32.totalorder %s28, 1
      %p177 = por %p175, %p176
      %p179 = scmp.ne.s32.totalorder %s164, %s178
      %p180 = scmp.eq.s32.totalorder %s28, 0
      %p181 = por %p179, %p180
      %s183 = sadd.s32 %s182, 1
      %p186 = scmp.eq.s32.totalorder %s22, 1
      %p187 = scmp.ne.s32.totalorder %s182, %s184
      %p188 = scmp.eq.s32.totalorder %s22, 0
      %p189 = por %p187, %p188
      %p190 = scmp.ne.s32.totalorder %s182, %s184
      %p191 = scmp.eq.s32.totalorder %s27, 1
      %p192 = por %p190, %p191
      %p193 = scmp.ne.s32.totalorder %s184, %s185
      %p194 = scmp.eq.s32.totalorder %s27, 0
      %p195 = por %p193, %p194
      %p196 = scmp.ne.s32.totalorder %s184, %s185
      %p197 = scmp.eq.s32.totalorder %s28, 1
      %p198 = por %p196, %p197
      %p200 = scmp.ne.s32.totalorder %s185, %s199
      %p201 = scmp.eq.s32.totalorder %s28, 0
      %p202 = por %p200, %p201
      %s203 = ssub.s32 %s29, %s41
      %p204 = scmp.eq.s32.totalorder %s203, 0
      %s206 = sadd.s32 %s205, 1
      %s207 = scalar_select %p204, %s205, %s206
      %p210 = pneg %p204
      %p211 = scmp.eq.s32.totalorder %s22, 1
      %p212 = por %p210, %p211
      %p213 = scmp.ne.s32.totalorder %s205, %s208
      %p214 = scmp.eq.s32.totalorder %s22, 0
      %p215 = por %p213, %p214
      %p216 = scmp.ne.s32.totalorder %s205, %s208
      %p217 = scmp.eq.s32.totalorder %s27, 1
      %p218 = por %p216, %p217
      %p219 = scmp.ne.s32.totalorder %s208, %s209
      %p220 = scmp.eq.s32.totalorder %s27, 0
      %p221 = por %p219, %p220
      %p222 = scmp.ne.s32.totalorder %s208, %s209
      %p223 = scmp.eq.s32.totalorder %s28, 1
      %p224 = por %p222, %p223
      %p226 = scmp.ne.s32.totalorder %s209, %s225
      %p227 = scmp.eq.s32.totalorder %s28, 0
      %p228 = por %p226, %p227
      %s229 = sadd.s32 %s29, %s30
      %s230 = sadd.s32 %s41, %s37
      %s231 = ssub.s32 %s229, %s230
      %p232 = scmp.eq.s32.totalorder %s231, 0
      %s234 = sadd.s32 %s233, 1
      %s235 = scalar_select %p232, %s233, %s234
      %p238 = pneg %p232
      %p239 = scmp.eq.s32.totalorder %s22, 1
      %p240 = por %p238, %p239
      %p241 = scmp.ne.s32.totalorder %s233, %s236
      %p242 = scmp.eq.s32.totalorder %s22, 0
      %p243 = por %p241, %p242
      %p244 = scmp.ne.s32.totalorder %s233, %s236
      %p245 = scmp.eq.s32.totalorder %s27, 1
      %p246 = por %p244, %p245
      %p247 = scmp.ne.s32.totalorder %s236, %s237
      %p248 = scmp.eq.s32.totalorder %s27, 0
      %p249 = por %p247, %p248
      %p250 = scmp.ne.s32.totalorder %s236, %s237
      %p251 = scmp.eq.s32.totalorder %s28, 1
      %p252 = por %p250, %p251
      %p254 = scmp.ne.s32.totalorder %s237, %s253
      %p255 = scmp.eq.s32.totalorder %s28, 0
      %p256 = por %p254, %p255
      %p257 = scmp.le.s32.totalorder 1, %s22
      %p258 = scmp.lt.s32.totalorder %s22, 3
      %p259 = pnand %p257, %p258
      %p260 = pneg %p259
      // Predicated region
      $region9: #{tpu_custom_call.1} parent=5 // pred_check
        _
      $region10: #{tpu_custom_call.1} parent=5 // pred_check_branch
        %262 = sbr.rel (%p259) target = $region12
      $region11: #{tpu_custom_call.1} parent=5 // pred_region
        %s263 = ssub.s32 %s22, 1
        // Predicated region
        $region13: #{tpu_custom_call.1} parent=11 // pred_check
          %p264 = pneg %p111
        $region14: #{tpu_custom_call.1} parent=11 // pred_check_branch
          %266 = sbr.rel (%p264) target = $region16
        $region15: #{tpu_custom_call.1} parent=11 // pred_region
          %s268 = ssub.s32 256, 256
          %269 = vsyncadd [#allocation3], %s268
          %s270 = sshll.u32 [#allocation2], 4
          %s271 = int_to_ptr.vmem [resolvable:$true] %s270
          %276 = dma.hbm_to_vmem [thread:$0]  %s2, 256, %s271, [#allocation3], 64, 64, 4
        $region16: #{tpu_custom_call.1} parent=11 // pred_fallthru
          _
        // Predicated region
        $region17: #{tpu_custom_call.1} parent=11 // pred_check
          %p277 = pneg %p132
        $region18: #{tpu_custom_call.1} parent=11 // pred_check_branch
          %279 = sbr.rel (%p277) target = $region20
        $region19: #{tpu_custom_call.1} parent=11 // pred_region
          _
        $region20: #{tpu_custom_call.1} parent=11 // pred_fallthru
          _
        // Predicated region
        $region21: #{tpu_custom_call.1} parent=11 // pred_check
          %p280 = pneg %p153
        $region22: #{tpu_custom_call.1} parent=11 // pred_check_branch
          %282 = sbr.rel (%p280) target = $region24
        $region23: #{tpu_custom_call.1} parent=11 // pred_region
          _
        $region24: #{tpu_custom_call.1} parent=11 // pred_fallthru
          _
        // Predicated region
        $region25: #{tpu_custom_call.1} parent=11 // pred_check
          %p283 = pneg %p174
        $region26: #{tpu_custom_call.1} parent=11 // pred_check_branch
          %285 = sbr.rel (%p283) target = $region28
        $region27: #{tpu_custom_call.1} parent=11 // pred_region
          _
        $region28: #{tpu_custom_call.1} parent=11 // pred_fallthru
          _
        // Predicated region
        $region29: #{tpu_custom_call.1} parent=11 // pred_check
          %p286 = pneg %p195
        $region30: #{tpu_custom_call.1} parent=11 // pred_check_branch
          %288 = sbr.rel (%p286) target = $region32
        $region31: #{tpu_custom_call.1} parent=11 // pred_region
          _
        $region32: #{tpu_custom_call.1} parent=11 // pred_fallthru
          _
      $region12: #{tpu_custom_call.1} parent=5 // pred_fallthru
        _
      %p289 = scmp.lt.s32.totalorder %s22, 2
      // Predicated region
      $region33: #{tpu_custom_call.1} parent=5 // pred_check
        %p290 = pneg %p289
      $region34: #{tpu_custom_call.1} parent=5 // pred_check_branch
        %292 = sbr.rel (%p290) target = $region36
      $region35: #{tpu_custom_call.1} parent=5 // pred_region
        // Predicated region
        $region37: #{tpu_custom_call.1} parent=35 // pred_check
          %p293 = pneg %p56
        $region38: #{tpu_custom_call.1} parent=35 // pred_check_branch
          %295 = sbr.rel (%p293) target = $region40
        $region39: #{tpu_custom_call.1} parent=35 // pred_region
          %s296 = sadd.s32 %s29, %s30
          %p297 = scmp.lt.s32.totalorder %s296, 1
          %s298 = scalar_select %p297, %s296, 1
          %s299 = smul.addr %s298, 4
          %s300 = scalar_lea.vmem %s0, %s299
          %s301 = sadd.s32 %s29, %s30
        $region40: #{tpu_custom_call.1} parent=35 // pred_fallthru
          _
        // Predicated region
        $region41: #{tpu_custom_call.1} parent=35 // pred_check
          %p302 = pneg %p84
        $region42: #{tpu_custom_call.1} parent=35 // pred_check_branch
          %304 = sbr.rel (%p302) target = $region44
        $region43: #{tpu_custom_call.1} parent=35 // pred_region
          %s305 = sadd.s32 %s29, %s30
          %p306 = scmp.lt.s32.totalorder %s305, 1
          %s307 = scalar_select %p306, %s305, 1
          %s308 = smul.addr %s307, 8
          %s309 = scalar_lea.vmem %s1, %s308
          %s310 = sadd.s32 %s29, %s30
        $region44: #{tpu_custom_call.1} parent=35 // pred_fallthru
          _
      $region36: #{tpu_custom_call.1} parent=5 // pred_fallthru
        _
      %p311 = scmp.le.s32.totalorder 1, %s22
      %p312 = scmp.lt.s32.totalorder %s22, 3
      %p313 = pnand %p311, %p312
      %p314 = pneg %p313
      // Predicated region
      $region45: #{tpu_custom_call.1} parent=5 // pred_check
        _
      $region46: #{tpu_custom_call.1} parent=5 // pred_check_branch
        %316 = sbr.rel (%p313) target = $region48
      $region47: #{tpu_custom_call.1} parent=5 // pred_region
        %s317 = ssub.s32 %s22, 1
        // Predicated region
        $region49: #{tpu_custom_call.1} parent=47 // pred_check
          %p318 = pneg %p111
        $region50: #{tpu_custom_call.1} parent=47 // pred_check_branch
          %320 = sbr.rel (%p318) target = $region52
        $region51: #{tpu_custom_call.1} parent=47 // pred_region
          %321 = dma.done [#allocation3], 256
        $region52: #{tpu_custom_call.1} parent=47 // pred_fallthru
          _
        %s322 = sadd.s32 %s31, %s32
        %p323 = scmp.lt.s32.totalorder %s322, 1
        %s324 = scalar_select %p323, %s322, 1
        %s325 = smul.addr %s324, 4
        %s326 = scalar_lea.vmem %s0, %s325
        %p327 = pneg %p62
        %p328 = pneg %p59
        %s329 = sadd.s32 %s31, %s32
        %p330 = scmp.lt.s32.totalorder %s329, 1
        %s331 = scalar_select %p330, %s329, 1
        %s332 = smul.addr %s331, 8
        %s333 = scalar_lea.vmem %s1, %s332
        %p334 = pneg %p90
        %p335 = pneg %p87
        %p336 = pneg %p111
        %p337 = pneg %p108
        %p338 = pneg %p132
        %p339 = pneg %p129
        %p340 = pneg %p153
        %p341 = pneg %p150
        %p342 = pneg %p174
        %p343 = pneg %p171
        %p344 = pneg %p195
        %p345 = pneg %p192
        %p346 = pneg %p221
        %p347 = pneg %p218
        %s348 = sand.u32 %s208, 1
        %s349 = scalar_lea.sflag [#allocation4], %s348
        %s350 = sand.u32 %s208, 1
        %s351 = scalar_lea.vmem [#allocation5], %s350
        %p352 = pneg %p249
        %p353 = pneg %p246
        %s354 = sand.u32 %s236, 1
        %s355 = scalar_lea.sflag [#allocation7], %s354
        %s356 = sand.u32 %s236, 1
        %s357 = scalar_lea.vmem [#allocation6], %s356
        %s358 = sadd.s32 %s31, %s32
        %p359 = scmp.lt.s32.totalorder %s358, 1
        %s360 = scalar_select %p359, %s358, 1
        %s361 = smul.addr %s360, 4
        %s362 = scalar_lea.vmem %s0, %s361
        %s363 = sadd.s32 %s31, %s32
        %s364 = sadd.s32 %s31, %s32
        %p365 = scmp.lt.s32.totalorder %s364, 1
        %s366 = scalar_select %p365, %s364, 1
        %s367 = smul.addr %s366, 8
        %s368 = scalar_lea.vmem %s1, %s367
        %s369 = sadd.s32 %s31, %s32
        %s370 = sadd.s32 %s31, %s32
        %p372 = scmp.eq.s32.totalorder %s32, 0
        // Predicated region
        $region53: #{tpu_custom_call.1} parent=47 // pred_check
          %p373 = pneg %p372
        $region54: #{tpu_custom_call.1} parent=47 // pred_check_branch
          %375 = sbr.rel (%p373) target = $region56
        $region55: #{tpu_custom_call.1} parent=47 // pred_region
          %376 = vst [vmem:[%s351] sm:$0x1] 0.0
        $region56: #{tpu_custom_call.1} parent=47 // pred_fallthru
          _
        %v377 = vld [vmem:[%s362] sm:$0xf]
        %v378 = vld [vmem:[#allocation2] sm:$0xf]
        %v379 = vld [vmem:[#allocation2 + $0x4] sm:$0xf]
        %v380 = vld [vmem:[#allocation2 + $0x8] sm:$0xf]
        %v381 = vld [vmem:[#allocation2 + $0xc] sm:$0xf]
        %v382 = vld [vmem:[%s3] sm:$0x1]
        %v384 = vlaneseq
        %v385 = vshrl.u32 %v384, 7
        %v386 = vsub.s32 0, %v385
        %v387 = vrot.slane %v382, %v386
        %v393 = vunpack.c.l.b16 %v378
        %v394 = vunpack.c.l.b16 %v379
        %v395 = vunpack.c.l.b16 %v380
        %v396 = vunpack.c.l.b16 %v381
        %v397 = vpack.c.b16 %v394, %v393
        %v398 = vpack.c.b16 %v396, %v395
        %vm401 = vcmask 261120
        %v403 = vsel %vm401, %v377, 0
        %405 = vmatprep.subr.bf16.mxu0 0
        %406 = vmatpush1.bf16.msra.mxu0 0
        %407 = vmatprep.subr.bf16.mxu0 0
        %408 = vmatpush1.bf16.msra.mxu0 0
        %409 = vmatprep.subr.bf16.mxu0 0
        %410 = vmatpush1.bf16.msra.mxu0 0
        %411 = vmatprep.subr.bf16.mxu0 0
        %412 = vmatpush1.bf16.msra.mxu0 0
        %413 = vmatprep.subr.bf16.mxu0 0
        %414 = vmatpush1.bf16.msra.mxu0 0
        %415 = vmatprep.subr.bf16.mxu0 0
        %416 = vmatpush1.bf16.msra.mxu0 0
        %417 = vmatprep.subr.bf16.mxu0 0
        %418 = vmatpush1.bf16.msra.mxu0 %v398
        %419 = vmatprep.subr.bf16.mxu0 0
        %420 = vmatpush1.bf16.msra.mxu0 %v397
        %421 = vmatprep.subr.bf16.mxu0 0
        %422 = vmatpush2.bf16.msra.mxu0 0
        %423 = vmatprep.subr.bf16.mxu0 0
        %424 = vmatpush2.bf16.msra.mxu0 0
        %425 = vmatprep.subr.bf16.mxu0 0
        %426 = vmatpush2.bf16.msra.mxu0 0
        %427 = vmatprep.subr.bf16.mxu0 0
        %428 = vmatpush2.bf16.msra.mxu0 0
        %429 = vmatprep.subr.bf16.mxu0 0
        %430 = vmatpush2.bf16.msra.mxu0 0
        %431 = vmatprep.subr.bf16.mxu0 0
        %432 = vmatpush2.bf16.msra.mxu0 0
        %433 = vmatprep.subr.bf16.mxu0 0
        %434 = vmatpush2.bf16.msra.mxu0 0
        %435 = vmatprep.subr.bf16.mxu0 0
        %436 = vmatpush2.bf16.msra.mxu0 0
        %437 = vmatprep.mubr.bf16.mxu0 0
        %438 = vmatmul.mubr.bf16.gmra.mxu0 %v403
        %v439 = vpop.f32.mrf.mxu0
        %v440 = vadd.f32 %v387, %v439
        %v441 = vpop.f32.mrf.mxu0
        %v442 = vpop.f32.mrf.mxu0
        %v443 = vpop.f32.mrf.mxu0
        %444 = vdwg.mxu0
        %v445 = vmax.f32 %v440, 0.0
        %v446 = vpack.c.bf16 %v445, %v445
        %v447 = vld [vmem:[%s4] sm:$0xf]
        %v448 = vld [vmem:[%s4 + $0x4] sm:$0xf]
        %v449 = vld [vmem:[%s4 + $0x8] sm:$0xf]
        %v450 = vld [vmem:[%s4 + $0xc] sm:$0xf]
        %v451 = vld [vmem:[%s6] sm:$0x1]
        %v453 = vlaneseq
        %v454 = vshrl.u32 %v453, 7
        %v455 = vsub.s32 0, %v454
        %v456 = vrot.slane %v451, %v455
        %v462 = vunpack.c.l.b16 %v447
        %v463 = vunpack.c.l.b16 %v448
        %v464 = vunpack.c.l.b16 %v449
        %v465 = vunpack.c.l.b16 %v450
        %v466 = vpack.c.b16 %v463, %v462
        %v467 = vpack.c.b16 %v465, %v464
        %v471 = vsel %vm401, %v446, 0
        %473 = vmatprep.subr.bf16.mxu0 0
        %474 = vmatpush1.bf16.msra.mxu0 0
        %475 = vmatprep.subr.bf16.mxu0 0
        %476 = vmatpush1.bf16.msra.mxu0 0
        %477 = vmatprep.subr.bf16.mxu0 0
        %478 = vmatpush1.bf16.msra.mxu0 0
        %479 = vmatprep.subr.bf16.mxu0 0
        %480 = vmatpush1.bf16.msra.mxu0 0
        %481 = vmatprep.subr.bf16.mxu0 0
        %482 = vmatpush1.bf16.msra.mxu0 0
        %483 = vmatprep.subr.bf16.mxu0 0
        %484 = vmatpush1.bf16.msra.mxu0 0
        %485 = vmatprep.subr.bf16.mxu0 0
        %486 = vmatpush1.bf16.msra.mxu0 %v467
        %487 = vmatprep.subr.bf16.mxu0 0
        %488 = vmatpush1.bf16.msra.mxu0 %v466
        %489 = vmatprep.subr.bf16.mxu0 0
        %490 = vmatpush2.bf16.msra.mxu0 0
        %491 = vmatprep.subr.bf16.mxu0 0
        %492 = vmatpush2.bf16.msra.mxu0 0
        %493 = vmatprep.subr.bf16.mxu0 0
        %494 = vmatpush2.bf16.msra.mxu0 0
        %495 = vmatprep.subr.bf16.mxu0 0
        %496 = vmatpush2.bf16.msra.mxu0 0
        %497 = vmatprep.subr.bf16.mxu0 0
        %498 = vmatpush2.bf16.msra.mxu0 0
        %499 = vmatprep.subr.bf16.mxu0 0
        %500 = vmatpush2.bf16.msra.mxu0 0
        %501 = vmatprep.subr.bf16.mxu0 0
        %502 = vmatpush2.bf16.msra.mxu0 0
        %503 = vmatprep.subr.bf16.mxu0 0
        %504 = vmatpush2.bf16.msra.mxu0 0
        %505 = vmatprep.mubr.bf16.mxu0 0
        %506 = vmatmul.mubr.bf16.gmra.mxu0 %v471
        %v507 = vpop.f32.mrf.mxu0
        %v508 = vadd.f32 %v456, %v507
        %v509 = vpop.f32.mrf.mxu0
        %v510 = vpop.f32.mrf.mxu0
        %v511 = vpop.f32.mrf.mxu0
        %512 = vdwg.mxu0
        %v513 = vld [vmem:[%s368] sm:$0xff]
        %v514 = vadd.f32 %v508, %v513
        %vm515 = vcmask 130048
        %v516 = vsel %vm515, %v514, -inf
        %517 = vmax.xlane.f32.xlu0 %v516
        %v518 = vpop.xlane.xlu0 %517
        %v519 = vlaneseq
        %v520 = vand.u32 %v519, 127
        %vm521 = vcmp.eq.f32.partialorder %v514, %v518
        %v522 = vsel %vm521, %v520, 16
        %v523 = vsel %vm515, %v522, 2147483647
        %v524 = vand.u32 %v523, 65535
        %v525 = vshra.s32 %v523, 16
        %v526 = vcvt.s32.f32 %v524
        %v527 = vcvt.s32.f32 %v525
        %528 = vmin.xlane.f32.xlu0 %v527
        %v529 = vpop.xlane.xlu0 %528
        %vm530 = vcmp.eq.f32.partialorder %v527, %v529
        %v531 = vsel %vm530, %v526, inf
        %532 = vmin.xlane.f32.xlu0 %v531
        %v533 = vpop.xlane.xlu0 %532
        %v534 = vcvt.f32.s32 %v533
        %v535 = vcvt.f32.s32 %v529
        %v536 = vshll.u32 %v535, 16
        %v537 = vadd.s32 %v536, %v534
        %vm538 = vcmp.eq.s32.totalorder %v520, %v537
        %v539 = vsel %vm538, 1, 0
        %v540 = vcvt.s32.f32 %v539
        %v541 = vcvt.s32.f32 %v520
        %v543 = vsel %vm515, %v541, 0
        %v546 = vsel %vm515, %v540, 0
        %548 = vmatprep.subr.mxu0 0.0
        %549 = vmatpush1.xpose.msra.mxu0 0.0
        %550 = vmatprep.subr.mxu0 0.0
        %551 = vmatpush1.xpose.msra.mxu0 0.0
        %552 = vmatprep.subr.mxu0 0.0
        %553 = vmatpush1.xpose.msra.mxu0 0.0
        %554 = vmatprep.subr.mxu0 0.0
        %555 = vmatpush1.xpose.msra.mxu0 0.0
        %556 = vmatprep.subr.mxu0 0.0
        %557 = vmatpush1.xpose.msra.mxu0 0.0
        %558 = vmatprep.subr.mxu0 0.0
        %559 = vmatpush1.xpose.msra.mxu0 0.0
        %560 = vmatprep.subr.mxu0 0.0
        %561 = vmatpush1.xpose.msra.mxu0 0.0
        %562 = vmatprep.subr.mxu0 0.0
        %563 = vmatpush1.xpose.msra.mxu0 0.0
        %564 = vmatprep.subr.mxu0 0.0
        %565 = vmatpush1.xpose.msra.mxu0 0.0
        %566 = vmatprep.subr.mxu0 0.0
        %567 = vmatpush1.xpose.msra.mxu0 0.0
        %568 = vmatprep.subr.mxu0 0.0
        %569 = vmatpush1.xpose.msra.mxu0 0.0
        %570 = vmatprep.subr.mxu0 0.0
        %571 = vmatpush1.xpose.msra.mxu0 0.0
        %572 = vmatprep.subr.mxu0 0.0
        %573 = vmatpush1.xpose.msra.mxu0 0.0
        %574 = vmatprep.subr.mxu0 0.0
        %575 = vmatpush1.xpose.msra.mxu0 0.0
        %576 = vmatprep.subr.mxu0 0.0
        %577 = vmatpush1.xpose.msra.mxu0 0.0
        %578 = vmatprep.subr.mxu0 0.0
        %579 = vmatpush1.xpose.msra.mxu0 %v546
        %580 = vmatprep.subr.mxu0 0.0
        %581 = vmatpush2.xpose.msra.mxu0 0.0
        %582 = vmatprep.subr.mxu0 0.0
        %583 = vmatpush2.xpose.msra.mxu0 0.0
        %584 = vmatprep.subr.mxu0 0.0
        %585 = vmatpush2.xpose.msra.mxu0 0.0
        %586 = vmatprep.subr.mxu0 0.0
        %587 = vmatpush2.xpose.msra.mxu0 0.0
        %588 = vmatprep.subr.mxu0 0.0
        %589 = vmatpush2.xpose.msra.mxu0 0.0
        %590 = vmatprep.subr.mxu0 0.0
        %591 = vmatpush2.xpose.msra.mxu0 0.0
        %592 = vmatprep.subr.mxu0 0.0
        %593 = vmatpush2.xpose.msra.mxu0 0.0
        %594 = vmatprep.subr.mxu0 0.0
        %595 = vmatpush2.xpose.msra.mxu0 0.0
        %596 = vmatprep.subr.mxu0 0.0
        %597 = vmatpush2.xpose.msra.mxu0 0.0
        %598 = vmatprep.subr.mxu0 0.0
        %599 = vmatpush2.xpose.msra.mxu0 0.0
        %600 = vmatprep.subr.mxu0 0.0
        %601 = vmatpush2.xpose.msra.mxu0 0.0
        %602 = vmatprep.subr.mxu0 0.0
        %603 = vmatpush2.xpose.msra.mxu0 0.0
        %604 = vmatprep.subr.mxu0 0.0
        %605 = vmatpush2.xpose.msra.mxu0 0.0
        %606 = vmatprep.subr.mxu0 0.0
        %607 = vmatpush2.xpose.msra.mxu0 0.0
        %608 = vmatprep.subr.mxu0 0.0
        %609 = vmatpush2.xpose.msra.mxu0 0.0
        %610 = vmatprep.subr.mxu0 0.0
        %611 = vmatpush2.xpose.msra.mxu0 0.0
        %612 = vmatprep.mubr.f32.mxu0 0.0
        %613 = vmatmul.mubr.f32.gmra.mxu0 %v543
        %v614 = vpop.f32.mrf.mxu0
        %v615 = vadd.f32 0.0, %v614
        %v616 = vpop.f32.mrf.mxu0
        %617 = vdwg.mxu0
        %v618 = vcvt.f32.s32.to.zero.pseudo %v615
        %vm619 = vcmask 57344
        %620 = vst.msk [vmem:[%s357] sm:$0x1] %vm619, %v618
        %v621 = vsel %vm515, %v508, -inf
        %622 = vmax.xlane.f32.xlu0 %v621
        %v623 = vpop.xlane.xlu0 %622
        %v624 = vsub.f32 %v508, %v623
        %v625 = vmul.f32 %v624, 1.442695
        %v626 = vpow.pop %v625
        %v627 = vsel %vm515, %v626, 0.0
        %628 = vadd.xlane.f32.xlu0 %v627
        %v629 = vpop.xlane.xlu0 %628
        %v630 = vrcp.pop %v629
        %v631 = vmul.f32 %v626, %v630
        %v632 = vsub.f32 %v631, %v540
        %v633 = vpack.c.bf16 %v632, %v632
        %v634 = vld [vmem:[%s5] sm:$0xf]
        %v635 = vld [vmem:[%s5 + $0x4] sm:$0xf]
        %v638 = vunpack.c.l.b16 %v634
        %v639 = vunpack.c.l.b16 %v635
        %v640 = vpack.c.b16 %v639, %v638
        %v643 = vsel %vm515, %v633, 0
        %645 = vmatprep.subr.bf16.mxu0 0
        %646 = vmatpush1.bf16.msra.mxu0 0
        %647 = vmatprep.subr.bf16.mxu0 0
        %648 = vmatpush1.bf16.msra.mxu0 0
        %649 = vmatprep.subr.bf16.mxu0 0
        %650 = vmatpush1.bf16.msra.mxu0 0
        %651 = vmatprep.subr.bf16.mxu0 0
        %652 = vmatpush1.bf16.msra.mxu0 0
        %653 = vmatprep.subr.bf16.mxu0 0
        %654 = vmatpush1.bf16.msra.mxu0 0
        %655 = vmatprep.subr.bf16.mxu0 0
        %656 = vmatpush1.bf16.msra.mxu0 0
        %657 = vmatprep.subr.bf16.mxu0 0
        %658 = vmatpush1.bf16.msra.mxu0 0
        %659 = vmatprep.subr.bf16.mxu0 0
        %660 = vmatpush1.bf16.msra.mxu0 %v640
        %661 = vmatprep.subr.bf16.mxu0 0
        %662 = vmatpush2.bf16.msra.mxu0 0
        %663 = vmatprep.subr.bf16.mxu0 0
        %664 = vmatpush2.bf16.msra.mxu0 0
        %665 = vmatprep.subr.bf16.mxu0 0
        %666 = vmatpush2.bf16.msra.mxu0 0
        %667 = vmatprep.subr.bf16.mxu0 0
        %668 = vmatpush2.bf16.msra.mxu0 0
        %669 = vmatprep.subr.bf16.mxu0 0
        %670 = vmatpush2.bf16.msra.mxu0 0
        %671 = vmatprep.subr.bf16.mxu0 0
        %672 = vmatpush2.bf16.msra.mxu0 0
        %673 = vmatprep.subr.bf16.mxu0 0
        %674 = vmatpush2.bf16.msra.mxu0 0
        %675 = vmatprep.subr.bf16.mxu0 0
        %676 = vmatpush2.bf16.msra.mxu0 0
        %677 = vmatprep.mubr.bf16.mxu0 0
        %678 = vmatmul.mubr.bf16.gmra.mxu0 %v643
        %v679 = vpop.f32.mrf.mxu0
        %v680 = vadd.f32 0.0, %v679
        %v681 = vpop.f32.mrf.mxu0
        %v682 = vpop.f32.mrf.mxu0
        %v683 = vpop.f32.mrf.mxu0
        %684 = vdwg.mxu0
        %vm685 = vcmp.gt.f32.partialorder %v440, 0.0
        %v686 = vsel %vm685, 1, 0
        %v687 = vcvt.s32.f32 %v686
        %v688 = vmul.f32 %v680, %v687
        %v689 = vunpack.c.l.bf16 %v377
        %v690 = vmul.f32 %v632, %v632
        %v691 = vsel %vm515, %v690, 0.0
        %692 = vadd.xlane.f32.xlu0 %v691
        %v693 = vpop.xlane.xlu0 %692
        %v694 = vmul.f32 %v445, %v445
        %v695 = vsel %vm401, %v694, 0.0
        %696 = vadd.xlane.f32.xlu0 %v695
        %v697 = vpop.xlane.xlu0 %696
        %v698 = vmul.f32 %v688, %v688
        %v699 = vsel %vm401, %v698, 0.0
        %700 = vadd.xlane.f32.xlu0 %v699
        %v701 = vpop.xlane.xlu0 %700
        %v702 = vmul.f32 %v689, %v689
        %v703 = vsel %vm401, %v702, 0.0
        %704 = vadd.xlane.f32.xlu0 %v703
        %v705 = vpop.xlane.xlu0 %704
        %vm706 = vcmp.eq.s32.totalorder %v520, 0
        %v707 = vmul.f32 %v701, %v705
        %v708 = vsel %vm706, %v707, 0.0
        %vm709 = vcmp.eq.s32.totalorder %v520, 1
        %v710 = vsel %vm709, %v701, 0.0
        %v711 = vadd.f32 %v708, %v710
        %vm712 = vcmp.eq.s32.totalorder %v520, 2
        %v713 = vmul.f32 %v693, %v697
        %v714 = vsel %vm712, %v713, 0.0
        %v715 = vadd.f32 %v711, %v714
        %vm716 = vcmp.eq.s32.totalorder %v520, 3
        %v717 = vsel %vm716, %v693, 0.0
        %v718 = vadd.f32 %v715, %v717
        %v719 = vld [vmem:[%s351] sm:$0x1]
        %v720 = vrot.slane %v718, 4
        %v721 = vadd.f32 %v718, %v720
        %v722 = vrot.slane %v721, 2
        %v723 = vadd.f32 %v721, %v722
        %v724 = vrot.slane %v723, 1
        %v725 = vadd.f32 %v723, %v724
        %v726 = vadd.f32 %v719, %v725
        %727 = vst [vmem:[%s351] sm:$0x1] %v726
        %s728 = sand.u32 %s208, 1
        %s729 = scalar_lea.sflag [#allocation4], %s728
        %s730 = sand.u32 %s208, 1
        %s731 = scalar_lea.vmem [#allocation5], %s730
        %s732 = sand.u32 %s236, 1
        %s733 = scalar_lea.sflag [#allocation7], %s732
        %s734 = sand.u32 %s236, 1
        %s735 = scalar_lea.vmem [#allocation6], %s734
        // Predicated region
        $region57: #{tpu_custom_call.1} parent=47 // pred_check
          %p736 = pneg %p218
        $region58: #{tpu_custom_call.1} parent=47 // pred_check_branch
          %738 = sbr.rel (%p736) target = $region60
        $region59: #{tpu_custom_call.1} parent=47 // pred_region
          %s740 = ssub.s32 16, 16
          %741 = vsyncadd %s729, %s740
          %s742 = smul.addr %s31, 16
          %s743 = scalar_lea.hbm %s7, %s742
          %s745 = sshll.u32 %s731, 4
          %s746 = int_to_ptr.vmem [resolvable:$true] %s745
          %748 = dma.vmem_to_hbm [thread:$0]  %s746, 16, %s743, %s729
        $region60: #{tpu_custom_call.1} parent=47 // pred_fallthru
          _
        // Predicated region
        $region61: #{tpu_custom_call.1} parent=47 // pred_check
          %p749 = pneg %p246
        $region62: #{tpu_custom_call.1} parent=47 // pred_check_branch
          %751 = sbr.rel (%p749) target = $region64
        $region63: #{tpu_custom_call.1} parent=47 // pred_region
          %s752 = sadd.s32 %s31, %s32
          %s754 = ssub.s32 16, 16
          %755 = vsyncadd %s733, %s754
          %s756 = smul.addr %s752, 16
          %s757 = scalar_lea.hbm %s8, %s756
          %s759 = sshll.u32 %s735, 4
          %s760 = int_to_ptr.vmem [resolvable:$true] %s759
          %762 = dma.vmem_to_hbm [thread:$0]  %s760, 16, %s757, %s733
        $region64: #{tpu_custom_call.1} parent=47 // pred_fallthru
          _
      $region48: #{tpu_custom_call.1} parent=5 // pred_fallthru
        _
      %p763 = scmp.le.s32.totalorder 2, %s22
      // Predicated region
      $region65: #{tpu_custom_call.1} parent=5 // pred_check
        %p764 = pneg %p763
      $region66: #{tpu_custom_call.1} parent=5 // pred_check_branch
        %766 = sbr.rel (%p764) target = $region68
      $region67: #{tpu_custom_call.1} parent=5 // pred_region
        %s767 = ssub.s32 %s22, 2
        // Predicated region
        $region69: #{tpu_custom_call.1} parent=67 // pred_check
          %p768 = pneg %p224
        $region70: #{tpu_custom_call.1} parent=67 // pred_check_branch
          %770 = sbr.rel (%p768) target = $region72
        $region71: #{tpu_custom_call.1} parent=67 // pred_region
          %s771 = sand.u32 %s209, 1
          %s772 = scalar_lea.sflag [#allocation4], %s771
          %s773 = sand.u32 %s209, 1
          %s774 = scalar_lea.vmem [#allocation5], %s773
          %775 = dma.done %s772, 16
        $region72: #{tpu_custom_call.1} parent=67 // pred_fallthru
          _
        // Predicated region
        $region73: #{tpu_custom_call.1} parent=67 // pred_check
          %p776 = pneg %p252
        $region74: #{tpu_custom_call.1} parent=67 // pred_check_branch
          %778 = sbr.rel (%p776) target = $region76
        $region75: #{tpu_custom_call.1} parent=67 // pred_region
          %s779 = sand.u32 %s237, 1
          %s780 = scalar_lea.sflag [#allocation7], %s779
          %s781 = sand.u32 %s237, 1
          %s782 = scalar_lea.vmem [#allocation6], %s781
          %783 = dma.done %s780, 16
        $region76: #{tpu_custom_call.1} parent=67 // pred_fallthru
          _
      $region68: #{tpu_custom_call.1} parent=5 // pred_fallthru
        _
    $region6: #{tpu_custom_call.1} parent=1 // loop_footer
      %s26 = sadd.s32 1, %s22
    $region7: #{tpu_custom_call.1} parent=1 // loop_footer_branch
      %21 = sbr.rel target = $region3
    $region8: #{tpu_custom_call.1} parent=1 // loop_exit
      _
    %784 = vsyncpa [#allocation3], 1
    %s785 = scalar_lea.sflag [#allocation3], 1
    %786 = vsyncpa %s785, 1
    %787 = vsyncpa [#allocation4], 1
    %s788 = scalar_lea.sflag [#allocation4], 1
    %789 = vsyncpa %s788, 1
    %790 = vsyncpa [#allocation7], 1
    %s791 = scalar_lea.sflag [#allocation7], 1
    %792 = vsyncpa %s791, 1

</llo_original>
